<compile_context>
chip_gen: v7x
topology: tpu7x:2x2x1
jax: 0.10.0
libtpu: 0.0.40
codegen_flags: <defaults>
</compile_context>

<pallas_src>
import functools
import numpy as np
import jax
import jax.numpy as jnp
from jax.experimental import pallas as pl
from jax.experimental.pallas import tpu as pltpu

# ---- module hyper-parameters (KANLayer defaults) ---------------------------
IN_DIM = 3
OUT_DIM = 2
NUM = 5            # number of grid intervals G
K = 3              # spline order
SIZE = IN_DIM * OUT_DIM
NC = NUM + K       # number of B-spline coefficients per spline (== 8 here)
NOISE_SCALE = 0.1
GRID_RANGE = (-1.0, 1.0)


def _cdiv(a, b):
    return -(-a // b)


def _round_up(a, m):
    return _cdiv(a, m) * m


# ---- init-time glue (plain numpy; matches kan.spline curve2coef) ------------
def _extend_grid(grid, k):
    # grid: (size, num+1) -> (size, num+1+2k)
    h = (grid[:, -1:] - grid[:, :1]) / (grid.shape[1] - 1)
    for _ in range(k):
        grid = np.concatenate([grid[:, :1] - h, grid, grid[:, -1:] + h], axis=1)
    return grid


def _b_batch_np(x, grid_ext, k):
    # x: (size, batch), grid_ext: (size, Gext) -> bases (size, Gext-k-1, batch)
    xb = x[:, None, :]
    g = grid_ext[:, :, None]
    B = ((xb >= g[:, :-1]) & (xb < g[:, 1:])).astype(np.float64)
    for d in range(1, k + 1):
        B = (xb - g[:, :-(d + 1)]) / (g[:, d:-1] - g[:, :-(d + 1)]) * B[:, :-1] \
          + (g[:, d + 1:] - xb) / (g[:, d + 1:] - g[:, 1:-d]) * B[:, 1:]
    return B


def _curve2coef_np(x_eval, y_eval, grid, k):
    # least-squares fit of spline coefficients (init only, not the hot path)
    grid_ext = _extend_grid(grid, k)
    B = _b_batch_np(x_eval, grid_ext, k)              # (size, ncoef, batch)
    mat = np.transpose(B, (0, 2, 1))                  # (size, batch, ncoef)
    coef = np.empty((mat.shape[0], mat.shape[2]), dtype=np.float64)
    for s in range(mat.shape[0]):
        coef[s] = np.linalg.lstsq(mat[s], y_eval[s], rcond=None)[0]
    return coef


# ---- Pallas kernel: the forward hot path ------------------------------------
def _kan_kernel(x_ref, grid_ref, w_ref, sb_ref, sp_ref,
                r1_ref, r2_ref, r3_ref,
                y_ref, post_ref, spl_ref, *, nrow):
    x = x_ref[...]                                   # (IN_DIM, TB)
    # recursion rows: shared-grid path uses x directly (IN_DIM rows); the
    # per-spline fallback fans x out to SIZE rows (s -> x[s % IN_DIM]).
    xr = x if nrow == IN_DIM else jnp.tile(x, (OUT_DIM, 1))

    g = grid_ref[...]                                # (nrow, Gext)
    # hoisted knot differences: reused by the order-0 bases and every level
    dx = xr[:, None, :] - g[:, :, None]              # (nrow, Gext, TB)

    # order-0 bases: (x >= g_j) & (x < g_{j+1})
    B = jnp.logical_and(dx[:, :-1] >= 0.0, dx[:, 1:] < 0.0).astype(jnp.float32)

    # Cox-de Boor recursion with host-precomputed reciprocals and shared
    # numerator:  w_j = (x - g_j) * r_j ;  B = w[:-1]*B[:-1] + (1-w[1:])*B[1:]
    r_refs = (r1_ref, r2_ref, r3_ref)
    for d in range(1, K + 1):
        r = r_refs[d - 1][...][:, :, None]           # (nrow, Gext-d, 1)
        w = dx[:, :-d] * r                           # (nrow, Gext-d, TB)
        B = w[:, :-1] * B[:, :-1] + (1.0 - w[:, 1:]) * B[:, 1:]
    # B: (nrow, NC, TB) with NC == 8 -> leading-dim collapse is layout-free

    B_flat = B.reshape(nrow * NC, B.shape[-1])       # (nrow*8, TB)
    # coefficient contraction on the otherwise-idle MXU
    y_spl = jnp.dot(w_ref[...], B_flat,
                    precision=jax.lax.Precision.HIGHEST,
                    preferred_element_type=jnp.float32)   # (SIZE, TB)
    spl_ref[...] = y_spl

    # SiLU residual on the un-tiled x: x * sigmoid(x), sigmoid via tanh (EUP)
    base_x = x * (0.5 * jnp.tanh(0.5 * x) + 0.5)     # (IN_DIM, TB)
    base = jnp.tile(base_x, (OUT_DIM, 1))            # (SIZE, TB)

    # mask already folded into the scales host-side
    y = sb_ref[...] * base + sp_ref[...] * y_spl     # (SIZE, TB)
    post_ref[...] = y

    # sum over in_dim with static sublane slices (no relayout)
    rows = [jnp.sum(y[o * IN_DIM:(o + 1) * IN_DIM], axis=0, keepdims=True)
            for o in range(OUT_DIM)]
    y_ref[...] = jnp.concatenate(rows, axis=0)       # (OUT_DIM, TB)


# ---- generation-aware tiling -------------------------------------------------
def _device_policy():
    """(num_tensorcores_per_chip, max lane tile)."""
    try:
        kind = jax.devices()[0].device_kind.lower()
    except Exception:
        kind = ""
    num_cores = 2 if "v7" in kind else 1
    # v5e: single vst slot + no bf16 VPU -> keep the live set smaller.
    if ("v5e" in kind) or ("v5 lite" in kind) or ("v5lite" in kind):
        tb_max = 1024
    else:
        tb_max = 4096
    return num_cores, tb_max


def _choose_tiling(batch, num_cores, tb_max):
    """Pick lane tile / padded batch.  Single-TC chips: one big step (per-step
    overhead ~0.35us dominates at small batch).  v7x: an even number of equal
    blocks so both TensorCores (sharding the parallel axis) get equal work."""
    pb128 = _round_up(max(batch, 1), 128)
    if num_cores <= 1:
        nblk = _cdiv(pb128, tb_max)
    else:
        nblk = num_cores * _cdiv(pb128, num_cores * tb_max)
    tb = _round_up(_cdiv(pb128, nblk), 128)
    pb = nblk * tb
    return tb, pb, nblk


# ---- wrapper -----------------------------------------------------------------
def kan_layer_forward(x, grid_ext, coef, scale_base, scale_sp, mask):
    """x: (batch, IN_DIM) float32. Returns (y, preacts, postacts, postspline)."""
    batch = x.shape[0]
    x_f32 = jnp.asarray(x, jnp.float32)
    x_t = x_f32.T                                    # (IN_DIM, batch)

    num_cores, tb_max = _device_policy()
    tb, pb, nblk = _choose_tiling(batch, num_cores, tb_max)
    if pb != batch:
        x_t = jnp.pad(x_t, ((0, 0), (0, pb - batch)))

    grid_np = np.asarray(grid_ext, np.float64)       # (SIZE, Gext)
    coef_np = np.asarray(coef, np.float64)           # (SIZE, NC)
    Gext = grid_np.shape[1]

    # Shared-grid check: pykan init (and grid updates driven by the same x per
    # input dim) give identical grids for every out_dim copy of an input dim.
    g3 = grid_np.reshape(OUT_DIM, IN_DIM, Gext)
    shared = bool(np.all(g3 == g3[:1]))
    if shared:
        nrow, grid_k = IN_DIM, g3[0]                 # (IN_DIM, Gext)
    else:
        nrow, grid_k = SIZE, grid_np                 # fallback: per-spline grids

    # batch-independent Cox-de Boor denominator reciprocals, guarded against
    # coincident knots (0 -> 0 instead of inf, so inf*0 NaNs cannot appear)
    recips = []
    for d in range(1, K + 1):
        den = grid_k[:, d:] - grid_k[:, :-d]
        rec = np.where(den == 0.0, 0.0, 1.0 / np.where(den == 0.0, 1.0, den))
        recips.append(jnp.asarray(rec, jnp.float32))

    # block-structured coefficient matrix for the MXU contraction:
    #   y_spl[s, b] = sum_c coef[s, c] * B[row(s), c, b]
    Wspl = np.zeros((SIZE, nrow * NC), np.float64)
    for s in range(SIZE):
        i = (s % IN_DIM) if shared else s
        Wspl[s, i * NC:(i + 1) * NC] = coef_np[s]
    Wspl = jnp.asarray(Wspl, jnp.float32)

    gk = jnp.asarray(grid_k, jnp.float32)
    mk = np.asarray(mask, np.float64).reshape(SIZE, 1)
    sb = jnp.asarray(np.asarray(scale_base, np.float64).reshape(SIZE, 1) * mk,
                     jnp.float32)
    sp = jnp.asarray(np.asarray(scale_sp, np.float64).reshape(SIZE, 1) * mk,
                     jnp.float32)

    out_shapes = (
        jax.ShapeDtypeStruct((OUT_DIM, pb), jnp.float32),   # y (transposed)
        jax.ShapeDtypeStruct((SIZE, pb), jnp.float32),      # postacts
        jax.ShapeDtypeStruct((SIZE, pb), jnp.float32),      # postspline
    )

    kernel = functools.partial(_kan_kernel, nrow=nrow)
    fn = pl.pallas_call(
        kernel,
        out_shape=out_shapes,
        grid_spec=pltpu.PrefetchScalarGridSpec(
            num_scalar_prefetch=0,
            grid=(nblk,),
            in_specs=[
                pl.BlockSpec((IN_DIM, tb), lambda b: (0, b)),
                pl.BlockSpec((nrow, Gext), lambda b: (0, 0)),
                pl.BlockSpec((SIZE, nrow * NC), lambda b: (0, 0)),
                pl.BlockSpec((SIZE, 1), lambda b: (0, 0)),
                pl.BlockSpec((SIZE, 1), lambda b: (0, 0)),
                pl.BlockSpec((nrow, Gext - 1), lambda b: (0, 0)),
                pl.BlockSpec((nrow, Gext - 2), lambda b: (0, 0)),
                pl.BlockSpec((nrow, Gext - 3), lambda b: (0, 0)),
            ],
            out_specs=[
                pl.BlockSpec((OUT_DIM, tb), lambda b: (0, b)),
                pl.BlockSpec((SIZE, tb), lambda b: (0, b)),
                pl.BlockSpec((SIZE, tb), lambda b: (0, b)),
            ],
        ),
        compiler_params=pltpu.CompilerParams(dimension_semantics=("parallel",)),
    )
    y_t, post_t, spl_t = fn(x_t, gk, Wspl, sb, sp, *recips)

    y = y_t[:, :batch].T                                    # (batch, OUT_DIM)
    postacts = post_t[:, :batch].T.reshape(batch, OUT_DIM, IN_DIM)
    postspline = spl_t[:, :batch].T.reshape(batch, OUT_DIM, IN_DIM)
    # preacts is x replicated over out_dim; no need to write it from the kernel
    preacts = jnp.broadcast_to(x_f32[:, None, :], (batch, OUT_DIM, IN_DIM))
    return y, preacts, postacts, postspline


# ---- pure numpy reference (mirrors PyTorch forward exactly) ------------------
def _forward_ref_np(x, grid_ext, coef, sb, sp, mk):
    batch = x.shape[0]
    xe = np.tile(x, (1, OUT_DIM)).T                      # (SIZE, batch)
    B = _b_batch_np(xe, grid_ext, K)                     # (SIZE, NC, batch)
    y_spl = np.einsum('sc,scb->sb', coef, B)
    base = xe * (1.0 / (1.0 + np.exp(-xe)))
    y = sb[:, None] * base + sp[:, None] * y_spl
    y = mk[:, None] * y
    y_out = y.reshape(OUT_DIM, IN_DIM, batch).sum(axis=1).T
    return (y_out,
            xe.T.reshape(batch, OUT_DIM, IN_DIM),
            y.T.reshape(batch, OUT_DIM, IN_DIM),
            y_spl.T.reshape(batch, OUT_DIM, IN_DIM))


# TODO(synk): update_grid_from_samples / initialize_grid_from_parent /
# get_subset / lock / unlock are init-time / bookkeeping paths (lstsq fits,
# index surgery) and are intentionally left host-side (numpy), not in Pallas.

if __name__ == "__main__":
    key = jax.random.PRNGKey(0)
    k_noise, k_x = jax.random.split(key)

    # deterministic parameter init, as in KANLayer.__init__
    base_grid = np.linspace(GRID_RANGE[0], GRID_RANGE[1], NUM + 1)
    grid = np.tile(base_grid[None, :], (SIZE, 1))                    # (SIZE, NUM+1)
    noises = (np.asarray(jax.random.uniform(k_noise, (SIZE, NUM + 1)),
                         dtype=np.float64) - 0.5) * NOISE_SCALE / NUM
    coef = _curve2coef_np(grid, noises, grid, K)                     # (SIZE, NC)
    grid_ext = _extend_grid(grid, K)                                 # (SIZE, NUM+1+2K)
    scale_base = np.ones(SIZE)
    scale_sp = np.ones(SIZE)
    mask = np.ones(SIZE)

    batch = 256
    x = jax.random.normal(k_x, (batch, IN_DIM), dtype=jnp.float32)

    y, preacts, postacts, postspline = kan_layer_forward(
        x, grid_ext, coef, scale_base, scale_sp, mask)
    jax.block_until_ready((y, preacts, postacts, postspline))

    # correctness check against a pure-numpy reimplementation of the torch code
    y_r, pre_r, post_r, spl_r = _forward_ref_np(
        np.asarray(x, np.float64), grid_ext, coef, scale_base, scale_sp, mask)
    np.testing.assert_allclose(np.asarray(y), y_r, rtol=1e-4, atol=1e-4)
    np.testing.assert_allclose(np.asarray(preacts), pre_r, rtol=1e-4, atol=1e-4)
    np.testing.assert_allclose(np.asarray(postacts), post_r, rtol=1e-4, atol=1e-4)
    np.testing.assert_allclose(np.asarray(postspline), spl_r, rtol=1e-4, atol=1e-4)

    assert y.shape == (batch, OUT_DIM)
    assert preacts.shape == postacts.shape == postspline.shape == (batch, OUT_DIM, IN_DIM)
    print("KERNEL_OK")
</pallas_src>

<mosaic_0001>
module attributes {stable_mosaic.version = 11 : i64} {
  func.func @_kan_kernel(%arg0: i32, %arg1: memref<3x256xf32, #tpu.memory_space<vmem>>, %arg2: memref<3x12xf32, #tpu.memory_space<vmem>>, %arg3: memref<6x24xf32, #tpu.memory_space<vmem>>, %arg4: memref<6x1xf32, #tpu.memory_space<vmem>>, %arg5: memref<6x1xf32, #tpu.memory_space<vmem>>, %arg6: memref<3x11xf32, #tpu.memory_space<vmem>>, %arg7: memref<3x10xf32, #tpu.memory_space<vmem>>, %arg8: memref<3x9xf32, #tpu.memory_space<vmem>>, %arg9: memref<2x256xf32, #tpu.memory_space<vmem>>, %arg10: memref<6x256xf32, #tpu.memory_space<vmem>>, %arg11: memref<6x256xf32, #tpu.memory_space<vmem>>) attributes {dimension_semantics = [#tpu.dimension_semantics<parallel>], iteration_bounds = array<i64: 1>, scalar_prefetch = 0 : i64, scratch_operands = 0 : i64, tpu.core_type = #tpu.core_type<tc>, window_params = [{transform_indices = @transform_0, window_bounds = array<i64: 3, 256>}, {pipeline_mode = #tpu.pipeline_mode<synchronous>, transform_indices = @transform_1, window_bounds = array<i64: 3, 12>}, {pipeline_mode = #tpu.pipeline_mode<synchronous>, transform_indices = @transform_2, window_bounds = array<i64: 6, 24>}, {pipeline_mode = #tpu.pipeline_mode<synchronous>, transform_indices = @transform_3, window_bounds = array<i64: 6, 1>}, {pipeline_mode = #tpu.pipeline_mode<synchronous>, transform_indices = @transform_4, window_bounds = array<i64: 6, 1>}, {pipeline_mode = #tpu.pipeline_mode<synchronous>, transform_indices = @transform_5, window_bounds = array<i64: 3, 11>}, {pipeline_mode = #tpu.pipeline_mode<synchronous>, transform_indices = @transform_6, window_bounds = array<i64: 3, 10>}, {pipeline_mode = #tpu.pipeline_mode<synchronous>, transform_indices = @transform_7, window_bounds = array<i64: 3, 9>}, {transform_indices = @transform_8, window_bounds = array<i64: 2, 256>}, {transform_indices = @transform_9, window_bounds = array<i64: 6, 256>}, {transform_indices = @transform_10, window_bounds = array<i64: 6, 256>}]} {
    %c0 = arith.constant 0 : index
    %c0_0 = arith.constant 0 : index
    %0 = vector.load %arg1[%c0, %c0_0] : memref<3x256xf32, #tpu.memory_space<vmem>>, vector<3x256xf32>
    %c0_1 = arith.constant 0 : index
    %c0_2 = arith.constant 0 : index
    %1 = vector.load %arg2[%c0_1, %c0_2] : memref<3x12xf32, #tpu.memory_space<vmem>>, vector<3x12xf32>
    %2 = vector.shape_cast %0 : vector<3x256xf32> to vector<3x1x256xf32>
    %3 = vector.shape_cast %1 : vector<3x12xf32> to vector<3x12x1xf32>
    %4 = vector.broadcast %2 : vector<3x1x256xf32> to vector<3x12x256xf32>
    %5 = vector.broadcast %3 : vector<3x12x1xf32> to vector<3x12x256xf32>
    %6 = arith.subf %4, %5 : vector<3x12x256xf32>
    %7 = vector.extract_strided_slice %6 {offsets = [0, 0, 0], sizes = [3, 11, 256], strides = [1, 1, 1]} : vector<3x12x256xf32> to vector<3x11x256xf32>
    %cst = arith.constant 0.000000e+00 : f32
    %8 = vector.broadcast %cst : f32 to vector<3x11x256xf32>
    %9 = arith.cmpf oge, %7, %8 : vector<3x11x256xf32>
    %10 = vector.extract_strided_slice %6 {offsets = [0, 1, 0], sizes = [3, 11, 256], strides = [1, 1, 1]} : vector<3x12x256xf32> to vector<3x11x256xf32>
    %cst_3 = arith.constant 0.000000e+00 : f32
    %11 = vector.broadcast %cst_3 : f32 to vector<3x11x256xf32>
    %12 = arith.cmpf olt, %10, %11 : vector<3x11x256xf32>
    %13 = arith.andi %9, %12 : vector<3x11x256xi1>
    %14 = arith.extui %13 : vector<3x11x256xi1> to vector<3x11x256xi32>
    %15 = arith.sitofp %14 : vector<3x11x256xi32> to vector<3x11x256xf32>
    %c0_4 = arith.constant 0 : index
    %c0_5 = arith.constant 0 : index
    %16 = vector.load %arg6[%c0_4, %c0_5] : memref<3x11xf32, #tpu.memory_space<vmem>>, vector<3x11xf32>
    %17 = vector.shape_cast %16 : vector<3x11xf32> to vector<3x11x1xf32>
    %18 = vector.extract_strided_slice %6 {offsets = [0, 0, 0], sizes = [3, 11, 256], strides = [1, 1, 1]} : vector<3x12x256xf32> to vector<3x11x256xf32>
    %19 = vector.broadcast %17 : vector<3x11x1xf32> to vector<3x11x256xf32>
    %20 = arith.mulf %18, %19 : vector<3x11x256xf32>
    %21 = vector.extract_strided_slice %20 {offsets = [0, 0, 0], sizes = [3, 10, 256], strides = [1, 1, 1]} : vector<3x11x256xf32> to vector<3x10x256xf32>
    %22 = vector.extract_strided_slice %15 {offsets = [0, 0, 0], sizes = [3, 10, 256], strides = [1, 1, 1]} : vector<3x11x256xf32> to vector<3x10x256xf32>
    %23 = arith.mulf %21, %22 : vector<3x10x256xf32>
    %24 = vector.extract_strided_slice %20 {offsets = [0, 1, 0], sizes = [3, 10, 256], strides = [1, 1, 1]} : vector<3x11x256xf32> to vector<3x10x256xf32>
    %cst_6 = arith.constant 1.000000e+00 : f32
    %25 = vector.broadcast %cst_6 : f32 to vector<3x10x256xf32>
    %26 = arith.subf %25, %24 : vector<3x10x256xf32>
    %27 = vector.extract_strided_slice %15 {offsets = [0, 1, 0], sizes = [3, 10, 256], strides = [1, 1, 1]} : vector<3x11x256xf32> to vector<3x10x256xf32>
    %28 = arith.mulf %26, %27 : vector<3x10x256xf32>
    %29 = arith.addf %23, %28 : vector<3x10x256xf32>
    %c0_7 = arith.constant 0 : index
    %c0_8 = arith.constant 0 : index
    %30 = vector.load %arg7[%c0_7, %c0_8] : memref<3x10xf32, #tpu.memory_space<vmem>>, vector<3x10xf32>
    %31 = vector.shape_cast %30 : vector<3x10xf32> to vector<3x10x1xf32>
    %32 = vector.extract_strided_slice %6 {offsets = [0, 0, 0], sizes = [3, 10, 256], strides = [1, 1, 1]} : vector<3x12x256xf32> to vector<3x10x256xf32>
    %33 = vector.broadcast %31 : vector<3x10x1xf32> to vector<3x10x256xf32>
    %34 = arith.mulf %32, %33 : vector<3x10x256xf32>
    %35 = vector.extract_strided_slice %34 {offsets = [0, 0, 0], sizes = [3, 9, 256], strides = [1, 1, 1]} : vector<3x10x256xf32> to vector<3x9x256xf32>
    %36 = vector.extract_strided_slice %29 {offsets = [0, 0, 0], sizes = [3, 9, 256], strides = [1, 1, 1]} : vector<3x10x256xf32> to vector<3x9x256xf32>
    %37 = arith.mulf %35, %36 : vector<3x9x256xf32>
    %38 = vector.extract_strided_slice %34 {offsets = [0, 1, 0], sizes = [3, 9, 256], strides = [1, 1, 1]} : vector<3x10x256xf32> to vector<3x9x256xf32>
    %cst_9 = arith.constant 1.000000e+00 : f32
    %39 = vector.broadcast %cst_9 : f32 to vector<3x9x256xf32>
    %40 = arith.subf %39, %38 : vector<3x9x256xf32>
    %41 = vector.extract_strided_slice %29 {offsets = [0, 1, 0], sizes = [3, 9, 256], strides = [1, 1, 1]} : vector<3x10x256xf32> to vector<3x9x256xf32>
    %42 = arith.mulf %40, %41 : vector<3x9x256xf32>
    %43 = arith.addf %37, %42 : vector<3x9x256xf32>
    %c0_10 = arith.constant 0 : index
    %c0_11 = arith.constant 0 : index
    %44 = vector.load %arg8[%c0_10, %c0_11] : memref<3x9xf32, #tpu.memory_space<vmem>>, vector<3x9xf32>
    %45 = vector.shape_cast %44 : vector<3x9xf32> to vector<3x9x1xf32>
    %46 = vector.extract_strided_slice %6 {offsets = [0, 0, 0], sizes = [3, 9, 256], strides = [1, 1, 1]} : vector<3x12x256xf32> to vector<3x9x256xf32>
    %47 = vector.broadcast %45 : vector<3x9x1xf32> to vector<3x9x256xf32>
    %48 = arith.mulf %46, %47 : vector<3x9x256xf32>
    %49 = vector.extract_strided_slice %48 {offsets = [0, 0, 0], sizes = [3, 8, 256], strides = [1, 1, 1]} : vector<3x9x256xf32> to vector<3x8x256xf32>
    %50 = vector.extract_strided_slice %43 {offsets = [0, 0, 0], sizes = [3, 8, 256], strides = [1, 1, 1]} : vector<3x9x256xf32> to vector<3x8x256xf32>
    %51 = arith.mulf %49, %50 : vector<3x8x256xf32>
    %52 = vector.extract_strided_slice %48 {offsets = [0, 1, 0], sizes = [3, 8, 256], strides = [1, 1, 1]} : vector<3x9x256xf32> to vector<3x8x256xf32>
    %cst_12 = arith.constant 1.000000e+00 : f32
    %53 = vector.broadcast %cst_12 : f32 to vector<3x8x256xf32>
    %54 = arith.subf %53, %52 : vector<3x8x256xf32>
    %55 = vector.extract_strided_slice %43 {offsets = [0, 1, 0], sizes = [3, 8, 256], strides = [1, 1, 1]} : vector<3x9x256xf32> to vector<3x8x256xf32>
    %56 = arith.mulf %54, %55 : vector<3x8x256xf32>
    %57 = arith.addf %51, %56 : vector<3x8x256xf32>
    %58 = vector.shape_cast %57 : vector<3x8x256xf32> to vector<24x256xf32>
    %c0_13 = arith.constant 0 : index
    %c0_14 = arith.constant 0 : index
    %59 = vector.load %arg3[%c0_13, %c0_14] : memref<6x24xf32, #tpu.memory_space<vmem>>, vector<6x24xf32>
    %cst_15 = arith.constant dense<0.000000e+00> : vector<6x256xf32>
    %60 = tpu.matmul %59, %58, %cst_15 {dimension_numbers = #tpu.dot_dimension_numbers<[1], [0], [0], [1], [0, 0, 1, 1], [], []>, precision = #tpu.contract_precision<fp32>} : vector<6x24xf32>, vector<24x256xf32>, vector<6x256xf32> -> vector<6x256xf32>
    %c0_16 = arith.constant 0 : index
    %c0_17 = arith.constant 0 : index
    %61 = vector.load %arg11[%c0_16, %c0_17] : memref<6x256xf32, #tpu.memory_space<vmem>>, vector<6x256xf32>
    tpu.vector_store %arg11[%c0_16, %c0_17], %60 {strides = array<i32>} : memref<6x256xf32, #tpu.memory_space<vmem>>, vector<6x256xf32>,
    %cst_18 = arith.constant 5.000000e-01 : f32
    %62 = vector.broadcast %cst_18 : f32 to vector<3x256xf32>
    %63 = arith.mulf %62, %0 : vector<3x256xf32>
    %64 = math.tanh %63 : vector<3x256xf32>
    %cst_19 = arith.constant 5.000000e-01 : f32
    %65 = vector.broadcast %cst_19 : f32 to vector<3x256xf32>
    %66 = arith.mulf %65, %64 : vector<3x256xf32>
    %cst_20 = arith.constant 5.000000e-01 : f32
    %67 = vector.broadcast %cst_20 : f32 to vector<3x256xf32>
    %68 = arith.addf %66, %67 : vector<3x256xf32>
    %69 = arith.mulf %0, %68 : vector<3x256xf32>
    %70 = tpu.concatenate %69, %69 in 0 : vector<3x256xf32>, vector<3x256xf32> -> vector<6x256xf32>
    %c0_21 = arith.constant 0 : index
    %c0_22 = arith.constant 0 : index
    %71 = vector.load %arg4[%c0_21, %c0_22] : memref<6x1xf32, #tpu.memory_space<vmem>>, vector<6x1xf32>
    %72 = vector.broadcast %71 : vector<6x1xf32> to vector<6x256xf32>
    %73 = arith.mulf %72, %70 : vector<6x256xf32>
    %c0_23 = arith.constant 0 : index
    %c0_24 = arith.constant 0 : index
    %74 = vector.load %arg5[%c0_23, %c0_24] : memref<6x1xf32, #tpu.memory_space<vmem>>, vector<6x1xf32>
    %75 = vector.broadcast %74 : vector<6x1xf32> to vector<6x256xf32>
    %76 = arith.mulf %75, %60 : vector<6x256xf32>
    %77 = arith.addf %73, %76 : vector<6x256xf32>
    %c0_25 = arith.constant 0 : index
    %c0_26 = arith.constant 0 : index
    %78 = vector.load %arg10[%c0_25, %c0_26] : memref<6x256xf32, #tpu.memory_space<vmem>>, vector<6x256xf32>
    tpu.vector_store %arg10[%c0_25, %c0_26], %77 {strides = array<i32>} : memref<6x256xf32, #tpu.memory_space<vmem>>, vector<6x256xf32>,
    %79 = vector.extract_strided_slice %77 {offsets = [0, 0], sizes = [3, 256], strides = [1, 1]} : vector<6x256xf32> to vector<3x256xf32>
    %cst_27 = arith.constant dense<0.000000e+00> : vector<256xf32>
    %80 = vector.multi_reduction <add>, %79, %cst_27 [0] : vector<3x256xf32> to vector<256xf32>
    %81 = vector.shape_cast %80 : vector<256xf32> to vector<1x256xf32>
    %82 = vector.extract_strided_slice %77 {offsets = [3, 0], sizes = [3, 256], strides = [1, 1]} : vector<6x256xf32> to vector<3x256xf32>
    %cst_28 = arith.constant dense<0.000000e+00> : vector<256xf32>
    %83 = vector.multi_reduction <add>, %82, %cst_28 [0] : vector<3x256xf32> to vector<256xf32>
    %84 = vector.shape_cast %83 : vector<256xf32> to vector<1x256xf32>
    %85 = tpu.concatenate %81, %84 in 0 : vector<1x256xf32>, vector<1x256xf32> -> vector<2x256xf32>
    %c0_29 = arith.constant 0 : index
    %c0_30 = arith.constant 0 : index
    %86 = vector.load %arg9[%c0_29, %c0_30] : memref<2x256xf32, #tpu.memory_space<vmem>>, vector<2x256xf32>
    tpu.vector_store %arg9[%c0_29, %c0_30], %85 {strides = array<i32>} : memref<2x256xf32, #tpu.memory_space<vmem>>, vector<2x256xf32>,
    return
  }
  func.func @transform_0(%arg0: i32) -> (i32, i32) {
    %c0_i32 = arith.constant 0 : i32
    %c0_i32_0 = arith.constant 0 : i32
    return %c0_i32, %arg0 : i32, i32
  }
  func.func @transform_1(%arg0: i32) -> (i32, i32) {
    %c0_i32 = arith.constant 0 : i32
    %c0_i32_0 = arith.constant 0 : i32
    %c0_i32_1 = arith.constant 0 : i32
    return %c0_i32, %c0_i32_0 : i32, i32
  }
  func.func @transform_2(%arg0: i32) -> (i32, i32) {
    %c0_i32 = arith.constant 0 : i32
    %c0_i32_0 = arith.constant 0 : i32
    %c0_i32_1 = arith.constant 0 : i32
    return %c0_i32, %c0_i32_0 : i32, i32
  }
  func.func @transform_3(%arg0: i32) -> (i32, i32) {
    %c0_i32 = arith.constant 0 : i32
    %c0_i32_0 = arith.constant 0 : i32
    %c0_i32_1 = arith.constant 0 : i32
    return %c0_i32, %c0_i32_0 : i32, i32
  }
  func.func @transform_4(%arg0: i32) -> (i32, i32) {
    %c0_i32 = arith.constant 0 : i32
    %c0_i32_0 = arith.constant 0 : i32
    %c0_i32_1 = arith.constant 0 : i32
    return %c0_i32, %c0_i32_0 : i32, i32
  }
  func.func @transform_5(%arg0: i32) -> (i32, i32) {
    %c0_i32 = arith.constant 0 : i32
    %c0_i32_0 = arith.constant 0 : i32
    %c0_i32_1 = arith.constant 0 : i32
    return %c0_i32, %c0_i32_0 : i32, i32
  }
  func.func @transform_6(%arg0: i32) -> (i32, i32) {
    %c0_i32 = arith.constant 0 : i32
    %c0_i32_0 = arith.constant 0 : i32
    %c0_i32_1 = arith.constant 0 : i32
    return %c0_i32, %c0_i32_0 : i32, i32
  }
  func.func @transform_7(%arg0: i32) -> (i32, i32) {
    %c0_i32 = arith.constant 0 : i32
    %c0_i32_0 = arith.constant 0 : i32
    %c0_i32_1 = arith.constant 0 : i32
    return %c0_i32, %c0_i32_0 : i32, i32
  }
  func.func @transform_8(%arg0: i32) -> (i32, i32) {
    %c0_i32 = arith.constant 0 : i32
    %c0_i32_0 = arith.constant 0 : i32
    return %c0_i32, %arg0 : i32, i32
  }
  func.func @transform_9(%arg0: i32) -> (i32, i32) {
    %c0_i32 = arith.constant 0 : i32
    %c0_i32_0 = arith.constant 0 : i32
    return %c0_i32, %arg0 : i32, i32
  }
  func.func @transform_10(%arg0: i32) -> (i32, i32) {
    %c0_i32 = arith.constant 0 : i32
    %c0_i32_0 = arith.constant 0 : i32
    return %c0_i32, %arg0 : i32, i32
  }
}

</mosaic_0001>

<llo_original>
// kernel: tpu_custom_call.1
$region0: #{tpu_custom_call.1}
  #allocation0 [shape = 'u32[]', space=smem, size = 0x4, offset = 0x4, fixed_abs, tag = 'smem constant byte address 0x4 - core index']
  #allocation1 [shape = 'u32[144,128]{1,0:T(1,128)}', space=vmem, size = 0x12000, scoped, tag = 'internal scratch']
  %s0 = inlined_call_operand.vmem [shape: f32[3,256], index: 0, kind: input, shape index: {}]
  %s1 = inlined_call_operand.vmem [shape: f32[3,12], index: 1, kind: input, shape index: {}]
  %s2 = inlined_call_operand.vmem [shape: f32[6,24], index: 2, kind: input, shape index: {}]
  %s3 = inlined_call_operand.vmem [shape: f32[6,1], index: 3, kind: input, shape index: {}]
  %s4 = inlined_call_operand.vmem [shape: f32[6,1], index: 4, kind: input, shape index: {}]
  %s5 = inlined_call_operand.vmem [shape: f32[3,11], index: 5, kind: input, shape index: {}]
  %s6 = inlined_call_operand.vmem [shape: f32[3,10], index: 6, kind: input, shape index: {}]
  %s7 = inlined_call_operand.vmem [shape: f32[3,9], index: 7, kind: input, shape index: {}]
  %s8 = inlined_call_operand.hbm [shape: f32[2,256], index: 8, kind: output, shape index: {0}]
  %s9 = inlined_call_operand.hbm [shape: f32[6,256], index: 9, kind: output, shape index: {1}]
  %s10 = inlined_call_operand.hbm [shape: f32[6,256], index: 10, kind: output, shape index: {2}]
  %11 = xla_tuple %s8, %s9, %s10
  %s12 = sld [smem:[#allocation0]]
  $region58: #{tpu_custom_call.1} parent=0
    _
  %s14 = ssub.s32 1, %s12
  %s15 = scalar_select 0, %s14, %s12
  $region1: #{tpu_custom_call.1} parent=0
    #allocation2 [shape = 'u8[2048]{0}', space=vmem, size = 0x800, scoped, tag = 'output window, operand 0, single buffered']
    #allocation3 [shape = 's32[1]{0}', space=sflag, size = 0x4, scoped, tag = 'scoped memory for tpu_custom_call.1']
    #allocation4 [shape = 'u8[8192]{0}', space=vmem, size = 0x2000, scoped, tag = 'output window, operand 1, single buffered']
    #allocation5 [shape = 's32[1]{0}', space=sflag, size = 0x4, scoped, tag = 'scoped memory for tpu_custom_call.1']
    #allocation6 [shape = 'u8[8192]{0}', space=vmem, size = 0x2000, scoped, tag = 'output window, operand 2, single buffered']
    %16 = vsyncpa [#allocation3], 0
    %17 = vsyncpa [#allocation5], 0
    // Predicated region
    $region2: #{tpu_custom_call.1} parent=1 // pred_check
      _
    $region3: #{tpu_custom_call.1} parent=1 // pred_check_branch
      %19 = sbr.rel (0) target = $region5
    $region4: #{tpu_custom_call.1} parent=1 // pred_region
      _
    $region5: #{tpu_custom_call.1} parent=1 // pred_fallthru
      _
    // Predicated region
    $region6: #{tpu_custom_call.1} parent=1 // pred_check
      _
    $region7: #{tpu_custom_call.1} parent=1 // pred_check_branch
      %21 = sbr.rel (0) target = $region9
    $region8: #{tpu_custom_call.1} parent=1 // pred_region
      _
    $region9: #{tpu_custom_call.1} parent=1 // pred_fallthru
      _
    // Predicated region
    $region10: #{tpu_custom_call.1} parent=1 // pred_check
      _
    $region11: #{tpu_custom_call.1} parent=1 // pred_check_branch
      %23 = sbr.rel (0) target = $region13
    $region12: #{tpu_custom_call.1} parent=1 // pred_region
      _
    $region13: #{tpu_custom_call.1} parent=1 // pred_fallthru
      _
    // Predicated region
    $region14: #{tpu_custom_call.1} parent=1 // pred_check
      _
    $region15: #{tpu_custom_call.1} parent=1 // pred_check_branch
      %25 = sbr.rel (0) target = $region17
    $region16: #{tpu_custom_call.1} parent=1 // pred_region
      _
    $region17: #{tpu_custom_call.1} parent=1 // pred_fallthru
      _
    // Predicated region
    $region18: #{tpu_custom_call.1} parent=1 // pred_check
      _
    $region19: #{tpu_custom_call.1} parent=1 // pred_check_branch
      %27 = sbr.rel (0) target = $region21
    $region20: #{tpu_custom_call.1} parent=1 // pred_region
      _
    $region21: #{tpu_custom_call.1} parent=1 // pred_fallthru
      _
    // Predicated region
    $region22: #{tpu_custom_call.1} parent=1 // pred_check
      _
    $region23: #{tpu_custom_call.1} parent=1 // pred_check_branch
      %29 = sbr.rel (0) target = $region25
    $region24: #{tpu_custom_call.1} parent=1 // pred_region
      _
    $region25: #{tpu_custom_call.1} parent=1 // pred_fallthru
      _
    // Predicated region
    $region26: #{tpu_custom_call.1} parent=1 // pred_check
      _
    $region27: #{tpu_custom_call.1} parent=1 // pred_check_branch
      %31 = sbr.rel (0) target = $region29
    $region28: #{tpu_custom_call.1} parent=1 // pred_region
      _
    $region29: #{tpu_custom_call.1} parent=1 // pred_fallthru
      _
    // Predicated region
    $region30: #{tpu_custom_call.1} parent=1 // pred_check
      _
    $region31: #{tpu_custom_call.1} parent=1 // pred_check_branch
      %33 = sbr.rel (0) target = $region33
    $region32: #{tpu_custom_call.1} parent=1 // pred_region
      _
    $region33: #{tpu_custom_call.1} parent=1 // pred_fallthru
      _
    %v34 = vld [vmem:[%s0] sm:$0x77]
    %v35 = vld [vmem:[%s1] sm:$0x7]
    %v38 = vunpack.c.l.s4 1966171168
    %v39 = vunpack.c.0.s8 %v38
    %v40 = vlaneseq
    %v41 = vshrl.u32 %v40, 7
    %v42 = vsub.s32 %v39, %v41
    %v43 = vrot.slane %v34, %v42
    %v44 = vcombine.high %v43, %v43
    %v46 = vunpack.c.l.s4 1966171168
    %v47 = vunpack.c.0.s8 %v46
    %v48 = vlaneseq
    %v49 = vshrl.u32 %v48, 7
    %v50 = vsub.s32 %v47, %v49
    %v51 = vrot.slane %v43, %v50
    %v53 = vunpack.c.l.s4 1966171168
    %v54 = vunpack.c.0.s8 %v53
    %v55 = vlaneseq
    %v56 = vshrl.u32 %v55, 7
    %v57 = vsub.s32 %v54, %v56
    %v58 = vrot.slane %v44, %v57
    %v59 = vcombine.high %v51, %v51
    %v60 = vlaneseq
    %v61 = vshrl.u32 %v60, 7
    %v62 = vsub.s32 0, %v61
    %v63 = vrot.slane %v35, %v62
    %65 = vbcast.lane.b32.xlu0 %v63, 256
    %v66 = vpop.permute.xlu0 %65
    %s68 = sor.u32 256, 8
    %69 = vbcast.lane.b32.xlu0 %v63, %s68
    %v70 = vpop.permute.xlu0 %69
    %v71 = vlaneseq
    %v72 = vshrl.u32 %v71, 7
    %v73 = vsub.s32 1, %v72
    %v74 = vrot.slane %v35, %v73
    %76 = vbcast.lane.b32.xlu0 %v74, 256
    %v77 = vpop.permute.xlu0 %76
    %s79 = sor.u32 256, 8
    %80 = vbcast.lane.b32.xlu0 %v74, %s79
    %v81 = vpop.permute.xlu0 %80
    %v82 = vlaneseq
    %v83 = vshrl.u32 %v82, 7
    %v84 = vsub.s32 2, %v83
    %v85 = vrot.slane %v35, %v84
    %87 = vbcast.lane.b32.xlu0 %v85, 256
    %v88 = vpop.permute.xlu0 %87
    %s90 = sor.u32 256, 8
    %91 = vbcast.lane.b32.xlu0 %v85, %s90
    %v92 = vpop.permute.xlu0 %91
    %v93 = vlaneseq
    %v94 = vshrl.u32 %v93, 7
    %v95 = vsub.s32 0, %v94
    %v96 = vrot.slane %v51, %v95
    %v97 = vlaneseq
    %v98 = vshrl.u32 %v97, 7
    %v99 = vsub.s32 1, %v98
    %v100 = vrot.slane %v51, %v99
    %v101 = vlaneseq
    %v102 = vshrl.u32 %v101, 7
    %v103 = vsub.s32 0, %v102
    %v104 = vrot.slane %v58, %v103
    %v105 = vlaneseq
    %v106 = vshrl.u32 %v105, 7
    %v107 = vsub.s32 1, %v106
    %v108 = vrot.slane %v58, %v107
    %v109 = vlaneseq
    %v110 = vshrl.u32 %v109, 7
    %v111 = vsub.s32 0, %v110
    %v112 = vrot.slane %v59, %v111
    %v113 = vlaneseq
    %v114 = vshrl.u32 %v113, 7
    %v115 = vsub.s32 1, %v114
    %v116 = vrot.slane %v59, %v115
    %v123 = vsub.f32 %v96, %v66
    %v124 = vsub.f32 %v100, %v66
    %v125 = vsub.f32 %v96, %v70
    %v126 = vsub.f32 %v100, %v70
    %v127 = vsub.f32 %v104, %v77
    %v128 = vsub.f32 %v108, %v77
    %v129 = vsub.f32 %v104, %v81
    %v130 = vsub.f32 %v108, %v81
    %v131 = vsub.f32 %v112, %v88
    %v132 = vsub.f32 %v116, %v88
    %v133 = vsub.f32 %v112, %v92
    %v134 = vsub.f32 %v116, %v92
    %vm135 = vcmp.ge.f32.partialorder %v123, 0.0
    %vm136 = vcmp.ge.f32.partialorder %v124, 0.0
    %vm137 = vcmp.ge.f32.partialorder %v125, 0.0
    %vm138 = vcmp.ge.f32.partialorder %v126, 0.0
    %vm139 = vcmp.ge.f32.partialorder %v127, 0.0
    %vm140 = vcmp.ge.f32.partialorder %v128, 0.0
    %vm141 = vcmp.ge.f32.partialorder %v129, 0.0
    %vm142 = vcmp.ge.f32.partialorder %v130, 0.0
    %vm143 = vcmp.ge.f32.partialorder %v131, 0.0
    %vm144 = vcmp.ge.f32.partialorder %v132, 0.0
    %vm145 = vcmp.ge.f32.partialorder %v133, 0.0
    %vm146 = vcmp.ge.f32.partialorder %v134, 0.0
    %vm147 = vcmp.lt.f32.partialorder %v123, 0.0
    %vm148 = vcmp.lt.f32.partialorder %v124, 0.0
    %vm149 = vcmp.lt.f32.partialorder %v125, 0.0
    %vm150 = vcmp.lt.f32.partialorder %v126, 0.0
    %vm151 = vcmp.lt.f32.partialorder %v127, 0.0
    %vm152 = vcmp.lt.f32.partialorder %v128, 0.0
    %vm153 = vcmp.lt.f32.partialorder %v129, 0.0
    %vm154 = vcmp.lt.f32.partialorder %v130, 0.0
    %vm155 = vcmp.lt.f32.partialorder %v131, 0.0
    %vm156 = vcmp.lt.f32.partialorder %v132, 0.0
    %vm157 = vcmp.lt.f32.partialorder %v133, 0.0
    %vm158 = vcmp.lt.f32.partialorder %v134, 0.0
    %v159 = vsel %vm147, 1, 0
    %v160 = vsel %vm148, 1, 0
    %v161 = vsel %vm149, 1, 0
    %v162 = vsel %vm150, 1, 0
    %v163 = vsel %vm151, 1, 0
    %v164 = vsel %vm152, 1, 0
    %v165 = vsel %vm153, 1, 0
    %v166 = vsel %vm154, 1, 0
    %v167 = vsel %vm155, 1, 0
    %v168 = vsel %vm156, 1, 0
    %v169 = vsel %vm157, 1, 0
    %v170 = vsel %vm158, 1, 0
    %vm171 = vcmask 1046528
    %v172 = vrot.slane %v159, 1
    %v173 = vrot.slane %v161, 1
    %v174 = vsel %vm171, %v172, %v173
    %v175 = vrot.slane %v160, 1
    %v176 = vrot.slane %v162, 1
    %v177 = vsel %vm171, %v175, %v176
    %v178 = vrot.slane %v163, 1
    %v179 = vrot.slane %v165, 1
    %v180 = vsel %vm171, %v178, %v179
    %v181 = vrot.slane %v164, 1
    %v182 = vrot.slane %v166, 1
    %v183 = vsel %vm171, %v181, %v182
    %v184 = vrot.slane %v167, 1
    %v185 = vrot.slane %v169, 1
    %v186 = vsel %vm171, %v184, %v185
    %v187 = vrot.slane %v168, 1
    %v188 = vrot.slane %v170, 1
    %v189 = vsel %vm171, %v187, %v188
    %vm190 = vcmp.ne.s32.totalorder %v174, 0
    %vm191 = vcmp.ne.s32.totalorder %v177, 0
    %vm192 = vcmp.ne.s32.totalorder %v173, 0
    %vm193 = vcmp.ne.s32.totalorder %v176, 0
    %vm194 = vcmp.ne.s32.totalorder %v180, 0
    %vm195 = vcmp.ne.s32.totalorder %v183, 0
    %vm196 = vcmp.ne.s32.totalorder %v179, 0
    %vm197 = vcmp.ne.s32.totalorder %v182, 0
    %vm198 = vcmp.ne.s32.totalorder %v186, 0
    %vm199 = vcmp.ne.s32.totalorder %v189, 0
    %vm200 = vcmp.ne.s32.totalorder %v185, 0
    %vm201 = vcmp.ne.s32.totalorder %v188, 0
    %vm202 = vmand %vm135, %vm190
    %vm203 = vmand %vm136, %vm191
    %vm204 = vmand %vm137, %vm192
    %vm205 = vmand %vm138, %vm193
    %vm206 = vmand %vm139, %vm194
    %vm207 = vmand %vm140, %vm195
    %vm208 = vmand %vm141, %vm196
    %vm209 = vmand %vm142, %vm197
    %vm210 = vmand %vm143, %vm198
    %vm211 = vmand %vm144, %vm199
    %vm212 = vmand %vm145, %vm200
    %vm213 = vmand %vm146, %vm201
    %v214 = vsel %vm202, 1, 0
    %v215 = vsel %vm203, 1, 0
    %v216 = vsel %vm204, 1, 0
    %v217 = vsel %vm205, 1, 0
    %v218 = vsel %vm206, 1, 0
    %v219 = vsel %vm207, 1, 0
    %v220 = vsel %vm208, 1, 0
    %v221 = vsel %vm209, 1, 0
    %v222 = vsel %vm210, 1, 0
    %v223 = vsel %vm211, 1, 0
    %v224 = vsel %vm212, 1, 0
    %v225 = vsel %vm213, 1, 0
    %v226 = vcvt.s32.f32 %v214
    %v227 = vcvt.s32.f32 %v215
    %v228 = vcvt.s32.f32 %v216
    %v229 = vcvt.s32.f32 %v217
    %v230 = vcvt.s32.f32 %v218
    %v231 = vcvt.s32.f32 %v219
    %v232 = vcvt.s32.f32 %v220
    %v233 = vcvt.s32.f32 %v221
    %v234 = vcvt.s32.f32 %v222
    %v235 = vcvt.s32.f32 %v223
    %v236 = vcvt.s32.f32 %v224
    %v237 = vcvt.s32.f32 %v225
    %v238 = vld [vmem:[%s5] sm:$0x7]
    %v239 = vlaneseq
    %v240 = vshrl.u32 %v239, 7
    %v241 = vsub.s32 0, %v240
    %v242 = vrot.slane %v238, %v241
    %244 = vbcast.lane.b32.xlu0 %v242, 256
    %v245 = vpop.permute.xlu0 %244
    %s247 = sor.u32 256, 8
    %248 = vbcast.lane.b32.xlu0 %v242, %s247
    %v249 = vpop.permute.xlu0 %248
    %v250 = vlaneseq
    %v251 = vshrl.u32 %v250, 7
    %v252 = vsub.s32 1, %v251
    %v253 = vrot.slane %v238, %v252
    %255 = vbcast.lane.b32.xlu0 %v253, 256
    %v256 = vpop.permute.xlu0 %255
    %s258 = sor.u32 256, 8
    %259 = vbcast.lane.b32.xlu0 %v253, %s258
    %v260 = vpop.permute.xlu0 %259
    %v261 = vlaneseq
    %v262 = vshrl.u32 %v261, 7
    %v263 = vsub.s32 2, %v262
    %v264 = vrot.slane %v238, %v263
    %266 = vbcast.lane.b32.xlu0 %v264, 256
    %v267 = vpop.permute.xlu0 %266
    %s269 = sor.u32 256, 8
    %270 = vbcast.lane.b32.xlu0 %v264, %s269
    %v271 = vpop.permute.xlu0 %270
    %v272 = vmul.f32 %v123, %v245
    %v273 = vmul.f32 %v124, %v245
    %v274 = vmul.f32 %v125, %v249
    %v275 = vmul.f32 %v126, %v249
    %v276 = vmul.f32 %v127, %v256
    %v277 = vmul.f32 %v128, %v256
    %v278 = vmul.f32 %v129, %v260
    %v279 = vmul.f32 %v130, %v260
    %v280 = vmul.f32 %v131, %v267
    %v281 = vmul.f32 %v132, %v267
    %v282 = vmul.f32 %v133, %v271
    %v283 = vmul.f32 %v134, %v271
    %v284 = vmul.f32 %v272, %v226
    %v285 = vmul.f32 %v273, %v227
    %v286 = vmul.f32 %v274, %v228
    %v287 = vmul.f32 %v275, %v229
    %v288 = vmul.f32 %v276, %v230
    %v289 = vmul.f32 %v277, %v231
    %v290 = vmul.f32 %v278, %v232
    %v291 = vmul.f32 %v279, %v233
    %v292 = vmul.f32 %v280, %v234
    %v293 = vmul.f32 %v281, %v235
    %v294 = vmul.f32 %v282, %v236
    %v295 = vmul.f32 %v283, %v237
    %v296 = vsub.f32 1.0, %v272
    %v297 = vsub.f32 1.0, %v273
    %v298 = vsub.f32 1.0, %v274
    %v299 = vsub.f32 1.0, %v275
    %v300 = vsub.f32 1.0, %v276
    %v301 = vsub.f32 1.0, %v277
    %v302 = vsub.f32 1.0, %v278
    %v303 = vsub.f32 1.0, %v279
    %v304 = vsub.f32 1.0, %v280
    %v305 = vsub.f32 1.0, %v281
    %v306 = vsub.f32 1.0, %v282
    %v307 = vsub.f32 1.0, %v283
    %v308 = vmul.f32 %v296, %v226
    %v309 = vmul.f32 %v297, %v227
    %v310 = vmul.f32 %v298, %v228
    %v311 = vmul.f32 %v299, %v229
    %v312 = vmul.f32 %v300, %v230
    %v313 = vmul.f32 %v301, %v231
    %v314 = vmul.f32 %v302, %v232
    %v315 = vmul.f32 %v303, %v233
    %v316 = vmul.f32 %v304, %v234
    %v317 = vmul.f32 %v305, %v235
    %v318 = vmul.f32 %v306, %v236
    %v319 = vmul.f32 %v307, %v237
    %v332 = vrot.slane %v308, 1
    %v333 = vrot.slane %v310, 1
    %v334 = vsel %vm171, %v332, %v333
    %v335 = vrot.slane %v309, 1
    %v336 = vrot.slane %v311, 1
    %v337 = vsel %vm171, %v335, %v336
    %v338 = vrot.slane %v312, 1
    %v339 = vrot.slane %v314, 1
    %v340 = vsel %vm171, %v338, %v339
    %v341 = vrot.slane %v313, 1
    %v342 = vrot.slane %v315, 1
    %v343 = vsel %vm171, %v341, %v342
    %v344 = vrot.slane %v316, 1
    %v345 = vrot.slane %v318, 1
    %v346 = vsel %vm171, %v344, %v345
    %v347 = vrot.slane %v317, 1
    %v348 = vrot.slane %v319, 1
    %v349 = vsel %vm171, %v347, %v348
    %v362 = vadd.f32 %v284, %v334
    %v363 = vadd.f32 %v285, %v337
    %v364 = vadd.f32 %v286, %v333
    %v365 = vadd.f32 %v287, %v336
    %v366 = vadd.f32 %v288, %v340
    %v367 = vadd.f32 %v289, %v343
    %v368 = vadd.f32 %v290, %v339
    %v369 = vadd.f32 %v291, %v342
    %v370 = vadd.f32 %v292, %v346
    %v371 = vadd.f32 %v293, %v349
    %v372 = vadd.f32 %v294, %v345
    %v373 = vadd.f32 %v295, %v348
    %v374 = vld [vmem:[%s6] sm:$0x7]
    %v375 = vlaneseq
    %v376 = vshrl.u32 %v375, 7
    %v377 = vsub.s32 0, %v376
    %v378 = vrot.slane %v374, %v377
    %380 = vbcast.lane.b32.xlu0 %v378, 256
    %v381 = vpop.permute.xlu0 %380
    %s383 = sor.u32 256, 8
    %384 = vbcast.lane.b32.xlu0 %v378, %s383
    %v385 = vpop.permute.xlu0 %384
    %v386 = vlaneseq
    %v387 = vshrl.u32 %v386, 7
    %v388 = vsub.s32 1, %v387
    %v389 = vrot.slane %v374, %v388
    %391 = vbcast.lane.b32.xlu0 %v389, 256
    %v392 = vpop.permute.xlu0 %391
    %s394 = sor.u32 256, 8
    %395 = vbcast.lane.b32.xlu0 %v389, %s394
    %v396 = vpop.permute.xlu0 %395
    %v397 = vlaneseq
    %v398 = vshrl.u32 %v397, 7
    %v399 = vsub.s32 2, %v398
    %v400 = vrot.slane %v374, %v399
    %402 = vbcast.lane.b32.xlu0 %v400, 256
    %v403 = vpop.permute.xlu0 %402
    %s405 = sor.u32 256, 8
    %406 = vbcast.lane.b32.xlu0 %v400, %s405
    %v407 = vpop.permute.xlu0 %406
    %v408 = vmul.f32 %v123, %v381
    %v409 = vmul.f32 %v124, %v381
    %v410 = vmul.f32 %v125, %v385
    %v411 = vmul.f32 %v126, %v385
    %v412 = vmul.f32 %v127, %v392
    %v413 = vmul.f32 %v128, %v392
    %v414 = vmul.f32 %v129, %v396
    %v415 = vmul.f32 %v130, %v396
    %v416 = vmul.f32 %v131, %v403
    %v417 = vmul.f32 %v132, %v403
    %v418 = vmul.f32 %v133, %v407
    %v419 = vmul.f32 %v134, %v407
    %v420 = vmul.f32 %v408, %v362
    %v421 = vmul.f32 %v409, %v363
    %v422 = vmul.f32 %v410, %v364
    %v423 = vmul.f32 %v411, %v365
    %v424 = vmul.f32 %v412, %v366
    %v425 = vmul.f32 %v413, %v367
    %v426 = vmul.f32 %v414, %v368
    %v427 = vmul.f32 %v415, %v369
    %v428 = vmul.f32 %v416, %v370
    %v429 = vmul.f32 %v417, %v371
    %v430 = vmul.f32 %v418, %v372
    %v431 = vmul.f32 %v419, %v373
    %v432 = vsub.f32 1.0, %v408
    %v433 = vsub.f32 1.0, %v409
    %v434 = vsub.f32 1.0, %v410
    %v435 = vsub.f32 1.0, %v411
    %v436 = vsub.f32 1.0, %v412
    %v437 = vsub.f32 1.0, %v413
    %v438 = vsub.f32 1.0, %v414
    %v439 = vsub.f32 1.0, %v415
    %v440 = vsub.f32 1.0, %v416
    %v441 = vsub.f32 1.0, %v417
    %v442 = vsub.f32 1.0, %v418
    %v443 = vsub.f32 1.0, %v419
    %v444 = vmul.f32 %v432, %v362
    %v445 = vmul.f32 %v433, %v363
    %v446 = vmul.f32 %v434, %v364
    %v447 = vmul.f32 %v435, %v365
    %v448 = vmul.f32 %v436, %v366
    %v449 = vmul.f32 %v437, %v367
    %v450 = vmul.f32 %v438, %v368
    %v451 = vmul.f32 %v439, %v369
    %v452 = vmul.f32 %v440, %v370
    %v453 = vmul.f32 %v441, %v371
    %v454 = vmul.f32 %v442, %v372
    %v455 = vmul.f32 %v443, %v373
    %v468 = vrot.slane %v444, 1
    %v469 = vrot.slane %v446, 1
    %v470 = vsel %vm171, %v468, %v469
    %v471 = vrot.slane %v445, 1
    %v472 = vrot.slane %v447, 1
    %v473 = vsel %vm171, %v471, %v472
    %v474 = vrot.slane %v448, 1
    %v475 = vrot.slane %v450, 1
    %v476 = vsel %vm171, %v474, %v475
    %v477 = vrot.slane %v449, 1
    %v478 = vrot.slane %v451, 1
    %v479 = vsel %vm171, %v477, %v478
    %v480 = vrot.slane %v452, 1
    %v481 = vrot.slane %v454, 1
    %v482 = vsel %vm171, %v480, %v481
    %v483 = vrot.slane %v453, 1
    %v484 = vrot.slane %v455, 1
    %v485 = vsel %vm171, %v483, %v484
    %v498 = vadd.f32 %v420, %v470
    %v499 = vadd.f32 %v421, %v473
    %v500 = vadd.f32 %v422, %v469
    %v501 = vadd.f32 %v423, %v472
    %v502 = vadd.f32 %v424, %v476
    %v503 = vadd.f32 %v425, %v479
    %v504 = vadd.f32 %v426, %v475
    %v505 = vadd.f32 %v427, %v478
    %v506 = vadd.f32 %v428, %v482
    %v507 = vadd.f32 %v429, %v485
    %v508 = vadd.f32 %v430, %v481
    %v509 = vadd.f32 %v431, %v484
    %v510 = vld [vmem:[%s7] sm:$0x7]
    %v511 = vlaneseq
    %v512 = vshrl.u32 %v511, 7
    %v513 = vsub.s32 0, %v512
    %v514 = vrot.slane %v510, %v513
    %516 = vbcast.lane.b32.xlu0 %v514, 256
    %v517 = vpop.permute.xlu0 %516
    %s519 = sor.u32 256, 8
    %520 = vbcast.lane.b32.xlu0 %v514, %s519
    %v521 = vpop.permute.xlu0 %520
    %v522 = vlaneseq
    %v523 = vshrl.u32 %v522, 7
    %v524 = vsub.s32 1, %v523
    %v525 = vrot.slane %v510, %v524
    %527 = vbcast.lane.b32.xlu0 %v525, 256
    %v528 = vpop.permute.xlu0 %527
    %s530 = sor.u32 256, 8
    %531 = vbcast.lane.b32.xlu0 %v525, %s530
    %v532 = vpop.permute.xlu0 %531
    %v533 = vlaneseq
    %v534 = vshrl.u32 %v533, 7
    %v535 = vsub.s32 2, %v534
    %v536 = vrot.slane %v510, %v535
    %538 = vbcast.lane.b32.xlu0 %v536, 256
    %v539 = vpop.permute.xlu0 %538
    %s541 = sor.u32 256, 8
    %542 = vbcast.lane.b32.xlu0 %v536, %s541
    %v543 = vpop.permute.xlu0 %542
    %v544 = vmul.f32 %v123, %v517
    %v545 = vmul.f32 %v124, %v517
    %v546 = vmul.f32 %v125, %v521
    %v547 = vmul.f32 %v126, %v521
    %v548 = vmul.f32 %v127, %v528
    %v549 = vmul.f32 %v128, %v528
    %v550 = vmul.f32 %v129, %v532
    %v551 = vmul.f32 %v130, %v532
    %v552 = vmul.f32 %v131, %v539
    %v553 = vmul.f32 %v132, %v539
    %v554 = vmul.f32 %v133, %v543
    %v555 = vmul.f32 %v134, %v543
    %v556 = vmul.f32 %v544, %v498
    %v557 = vmul.f32 %v545, %v499
    %v558 = vmul.f32 %v548, %v502
    %v559 = vmul.f32 %v549, %v503
    %v560 = vmul.f32 %v552, %v506
    %v561 = vmul.f32 %v553, %v507
    %v562 = vsub.f32 1.0, %v544
    %v563 = vsub.f32 1.0, %v545
    %v564 = vsub.f32 1.0, %v546
    %v565 = vsub.f32 1.0, %v547
    %v566 = vsub.f32 1.0, %v548
    %v567 = vsub.f32 1.0, %v549
    %v568 = vsub.f32 1.0, %v550
    %v569 = vsub.f32 1.0, %v551
    %v570 = vsub.f32 1.0, %v552
    %v571 = vsub.f32 1.0, %v553
    %v572 = vsub.f32 1.0, %v554
    %v573 = vsub.f32 1.0, %v555
    %v574 = vmul.f32 %v562, %v498
    %v575 = vmul.f32 %v563, %v499
    %v576 = vmul.f32 %v564, %v500
    %v577 = vmul.f32 %v565, %v501
    %v578 = vmul.f32 %v566, %v502
    %v579 = vmul.f32 %v567, %v503
    %v580 = vmul.f32 %v568, %v504
    %v581 = vmul.f32 %v569, %v505
    %v582 = vmul.f32 %v570, %v506
    %v583 = vmul.f32 %v571, %v507
    %v584 = vmul.f32 %v572, %v508
    %v585 = vmul.f32 %v573, %v509
    %v598 = vrot.slane %v574, 1
    %v599 = vrot.slane %v576, 1
    %v600 = vsel %vm171, %v598, %v599
    %v601 = vrot.slane %v575, 1
    %v602 = vrot.slane %v577, 1
    %v603 = vsel %vm171, %v601, %v602
    %v604 = vrot.slane %v578, 1
    %v605 = vrot.slane %v580, 1
    %v606 = vsel %vm171, %v604, %v605
    %v607 = vrot.slane %v579, 1
    %v608 = vrot.slane %v581, 1
    %v609 = vsel %vm171, %v607, %v608
    %v610 = vrot.slane %v582, 1
    %v611 = vrot.slane %v584, 1
    %v612 = vsel %vm171, %v610, %v611
    %v613 = vrot.slane %v583, 1
    %v614 = vrot.slane %v585, 1
    %v615 = vsel %vm171, %v613, %v614
    %v622 = vadd.f32 %v556, %v600
    %v623 = vadd.f32 %v557, %v603
    %v624 = vadd.f32 %v558, %v606
    %v625 = vadd.f32 %v559, %v609
    %v626 = vadd.f32 %v560, %v612
    %v627 = vadd.f32 %v561, %v615
    %v628 = vld [vmem:[%s2] sm:$0x3f]
    %vm629 = vcmask 195584
    %v631 = vsel %vm629, %v628, 0
    %v633 = vand.u32 %v623, 4294901760
    %634 = vmatprep.subr.mxu0 %v633
    %v635 = vand.u32 %v622, 4294901760
    %636 = vmatpush1.msra.mxu0 %v635
    %v637 = vand.u32 %v625, 4294901760
    %638 = vmatprep.subr.mxu0 %v637
    %v639 = vand.u32 %v624, 4294901760
    %640 = vmatpush1.msra.mxu0 %v639
    %v641 = vand.u32 %v627, 4294901760
    %642 = vmatprep.subr.mxu0 %v641
    %v643 = vand.u32 %v626, 4294901760
    %644 = vmatpush1.msra.mxu0 %v643
    %645 = vmatprep.subr.mxu0 0.0
    %646 = vmatpush1.msra.mxu0 0.0
    %647 = vmatprep.subr.mxu0 0.0
    %648 = vmatpush1.msra.mxu0 0.0
    %649 = vmatprep.subr.mxu0 0.0
    %650 = vmatpush1.msra.mxu0 0.0
    %651 = vmatprep.subr.mxu0 0.0
    %652 = vmatpush1.msra.mxu0 0.0
    %653 = vmatprep.subr.mxu0 0.0
    %654 = vmatpush1.msra.mxu0 0.0
    %655 = vmatprep.subr.mxu0 0.0
    %656 = vmatpush1.msra.mxu0 0.0
    %657 = vmatprep.subr.mxu0 0.0
    %658 = vmatpush1.msra.mxu0 0.0
    %659 = vmatprep.subr.mxu0 0.0
    %660 = vmatpush1.msra.mxu0 0.0
    %661 = vmatprep.subr.mxu0 0.0
    %662 = vmatpush1.msra.mxu0 0.0
    %663 = vmatprep.subr.mxu0 0.0
    %664 = vmatpush1.msra.mxu0 0.0
    %665 = vmatprep.subr.mxu0 0.0
    %666 = vmatpush1.msra.mxu0 0.0
    %667 = vmatprep.subr.mxu0 0.0
    %668 = vmatpush1.msra.mxu0 0.0
    %669 = vmatprep.subr.mxu0 0.0
    %670 = vmatpush1.msra.mxu0 0.0
    %671 = vmatprep.subr.mxu0 0.0
    %672 = vmatpush1.msra.mxu0 0.0
    %673 = vmatprep.subr.mxu0 0.0
    %674 = vmatpush1.msra.mxu0 0.0
    %675 = vmatprep.subr.mxu0 0.0
    %676 = vmatpush1.msra.mxu0 0.0
    %677 = vmatprep.subr.mxu0 0.0
    %678 = vmatpush1.msra.mxu0 0.0
    %679 = vmatprep.subr.mxu0 0.0
    %680 = vmatpush1.msra.mxu0 0.0
    %681 = vmatprep.subr.mxu0 0.0
    %682 = vmatpush1.msra.mxu0 0.0
    %683 = vmatprep.subr.mxu0 0.0
    %684 = vmatpush1.msra.mxu0 0.0
    %685 = vmatprep.subr.mxu0 0.0
    %686 = vmatpush1.msra.mxu0 0.0
    %687 = vmatprep.subr.mxu0 0.0
    %688 = vmatpush1.msra.mxu0 0.0
    %689 = vmatprep.subr.mxu0 0.0
    %690 = vmatpush1.msra.mxu0 0.0
    %691 = vmatprep.subr.mxu0 0.0
    %692 = vmatpush1.msra.mxu0 0.0
    %693 = vmatprep.subr.mxu0 0.0
    %694 = vmatpush1.msra.mxu0 0.0
    %695 = vmatprep.subr.mxu0 0.0
    %696 = vmatpush1.msra.mxu0 0.0
    %697 = vmatprep.subr.mxu0 0.0
    %698 = vmatpush1.msra.mxu0 0.0
    %699 = vmatprep.subr.mxu0 0.0
    %700 = vmatpush1.msra.mxu0 0.0
    %701 = vmatprep.subr.mxu0 0.0
    %702 = vmatpush1.msra.mxu0 0.0
    %703 = vmatprep.mubr.f32.mxu0 0.0
    %v704 = vand.u32 %v631, 4294901760
    %v705 = vsub.f32 %v631, %v704
    %v706 = vand.u32 %v705, 4294901760
    %v707 = vsub.f32 %v705, %v706
    %v708 = vand.u32 %v707, 4294901760
    %709 = vmatmul.mubr.f32.gmra.mrb[0].mxu0 %v708
    %v710 = vpop.f32.mrb[0].mxu0
    %v711 = vadd.f32 0.0, %v710
    %v712 = vpop.f32.mrb[0].mxu0
    %v713 = vadd.f32 0.0, %v712
    %714 = vdwg.mxu0
    %v715 = vand.u32 %v623, 4294901760
    %v716 = vsub.f32 %v623, %v715
    %v717 = vand.u32 %v716, 4294901760
    %v718 = vsub.f32 %v716, %v717
    %v719 = vand.u32 %v718, 4294901760
    %720 = vmatprep.subr.mxu0 %v719
    %v721 = vand.u32 %v622, 4294901760
    %v722 = vsub.f32 %v622, %v721
    %v723 = vand.u32 %v722, 4294901760
    %v724 = vsub.f32 %v722, %v723
    %v725 = vand.u32 %v724, 4294901760
    %726 = vmatpush1.msra.mxu0 %v725
    %v727 = vand.u32 %v625, 4294901760
    %v728 = vsub.f32 %v625, %v727
    %v729 = vand.u32 %v728, 4294901760
    %v730 = vsub.f32 %v728, %v729
    %v731 = vand.u32 %v730, 4294901760
    %732 = vmatprep.subr.mxu0 %v731
    %v733 = vand.u32 %v624, 4294901760
    %v734 = vsub.f32 %v624, %v733
    %v735 = vand.u32 %v734, 4294901760
    %v736 = vsub.f32 %v734, %v735
    %v737 = vand.u32 %v736, 4294901760
    %738 = vmatpush1.msra.mxu0 %v737
    %v739 = vand.u32 %v627, 4294901760
    %v740 = vsub.f32 %v627, %v739
    %v741 = vand.u32 %v740, 4294901760
    %v742 = vsub.f32 %v740, %v741
    %v743 = vand.u32 %v742, 4294901760
    %744 = vmatprep.subr.mxu0 %v743
    %v745 = vand.u32 %v626, 4294901760
    %v746 = vsub.f32 %v626, %v745
    %v747 = vand.u32 %v746, 4294901760
    %v748 = vsub.f32 %v746, %v747
    %v749 = vand.u32 %v748, 4294901760
    %750 = vmatpush1.msra.mxu0 %v749
    %751 = vmatprep.subr.mxu0 0.0
    %752 = vmatpush1.msra.mxu0 0.0
    %753 = vmatprep.subr.mxu0 0.0
    %754 = vmatpush1.msra.mxu0 0.0
    %755 = vmatprep.subr.mxu0 0.0
    %756 = vmatpush1.msra.mxu0 0.0
    %757 = vmatprep.subr.mxu0 0.0
    %758 = vmatpush1.msra.mxu0 0.0
    %759 = vmatprep.subr.mxu0 0.0
    %760 = vmatpush1.msra.mxu0 0.0
    %761 = vmatprep.subr.mxu0 0.0
    %762 = vmatpush1.msra.mxu0 0.0
    %763 = vmatprep.subr.mxu0 0.0
    %764 = vmatpush1.msra.mxu0 0.0
    %765 = vmatprep.subr.mxu0 0.0
    %766 = vmatpush1.msra.mxu0 0.0
    %767 = vmatprep.subr.mxu0 0.0
    %768 = vmatpush1.msra.mxu0 0.0
    %769 = vmatprep.subr.mxu0 0.0
    %770 = vmatpush1.msra.mxu0 0.0
    %771 = vmatprep.subr.mxu0 0.0
    %772 = vmatpush1.msra.mxu0 0.0
    %773 = vmatprep.subr.mxu0 0.0
    %774 = vmatpush1.msra.mxu0 0.0
    %775 = vmatprep.subr.mxu0 0.0
    %776 = vmatpush1.msra.mxu0 0.0
    %777 = vmatprep.subr.mxu0 0.0
    %778 = vmatpush1.msra.mxu0 0.0
    %779 = vmatprep.subr.mxu0 0.0
    %780 = vmatpush1.msra.mxu0 0.0
    %781 = vmatprep.subr.mxu0 0.0
    %782 = vmatpush1.msra.mxu0 0.0
    %783 = vmatprep.subr.mxu0 0.0
    %784 = vmatpush1.msra.mxu0 0.0
    %785 = vmatprep.subr.mxu0 0.0
    %786 = vmatpush1.msra.mxu0 0.0
    %787 = vmatprep.subr.mxu0 0.0
    %788 = vmatpush1.msra.mxu0 0.0
    %789 = vmatprep.subr.mxu0 0.0
    %790 = vmatpush1.msra.mxu0 0.0
    %791 = vmatprep.subr.mxu0 0.0
    %792 = vmatpush1.msra.mxu0 0.0
    %793 = vmatprep.subr.mxu0 0.0
    %794 = vmatpush1.msra.mxu0 0.0
    %795 = vmatprep.subr.mxu0 0.0
    %796 = vmatpush1.msra.mxu0 0.0
    %797 = vmatprep.subr.mxu0 0.0
    %798 = vmatpush1.msra.mxu0 0.0
    %799 = vmatprep.subr.mxu0 0.0
    %800 = vmatpush1.msra.mxu0 0.0
    %801 = vmatprep.subr.mxu0 0.0
    %802 = vmatpush1.msra.mxu0 0.0
    %803 = vmatprep.subr.mxu0 0.0
    %804 = vmatpush1.msra.mxu0 0.0
    %805 = vmatprep.subr.mxu0 0.0
    %806 = vmatpush1.msra.mxu0 0.0
    %807 = vmatprep.subr.mxu0 0.0
    %808 = vmatpush1.msra.mxu0 0.0
    %809 = vmatprep.mubr.f32.mxu0 0.0
    %v810 = vand.u32 %v631, 4294901760
    %811 = vmatmul.mubr.f32.gmra.mrb[0].mxu0 %v810
    %v812 = vpop.f32.mrb[0].mxu0
    %v813 = vadd.f32 %v711, %v812
    %v814 = vpop.f32.mrb[0].mxu0
    %v815 = vadd.f32 %v713, %v814
    %816 = vdwg.mxu0
    %v817 = vand.u32 %v623, 4294901760
    %v818 = vsub.f32 %v623, %v817
    %819 = vmatprep.subr.mxu0 %v818
    %v820 = vand.u32 %v622, 4294901760
    %v821 = vsub.f32 %v622, %v820
    %822 = vmatpush1.msra.mxu0 %v821
    %v823 = vand.u32 %v625, 4294901760
    %v824 = vsub.f32 %v625, %v823
    %825 = vmatprep.subr.mxu0 %v824
    %v826 = vand.u32 %v624, 4294901760
    %v827 = vsub.f32 %v624, %v826
    %828 = vmatpush1.msra.mxu0 %v827
    %v829 = vand.u32 %v627, 4294901760
    %v830 = vsub.f32 %v627, %v829
    %831 = vmatprep.subr.mxu0 %v830
    %v832 = vand.u32 %v626, 4294901760
    %v833 = vsub.f32 %v626, %v832
    %834 = vmatpush1.msra.mxu0 %v833
    %835 = vmatprep.subr.mxu0 0.0
    %836 = vmatpush1.msra.mxu0 0.0
    %837 = vmatprep.subr.mxu0 0.0
    %838 = vmatpush1.msra.mxu0 0.0
    %839 = vmatprep.subr.mxu0 0.0
    %840 = vmatpush1.msra.mxu0 0.0
    %841 = vmatprep.subr.mxu0 0.0
    %842 = vmatpush1.msra.mxu0 0.0
    %843 = vmatprep.subr.mxu0 0.0
    %844 = vmatpush1.msra.mxu0 0.0
    %845 = vmatprep.subr.mxu0 0.0
    %846 = vmatpush1.msra.mxu0 0.0
    %847 = vmatprep.subr.mxu0 0.0
    %848 = vmatpush1.msra.mxu0 0.0
    %849 = vmatprep.subr.mxu0 0.0
    %850 = vmatpush1.msra.mxu0 0.0
    %851 = vmatprep.subr.mxu0 0.0
    %852 = vmatpush1.msra.mxu0 0.0
    %853 = vmatprep.subr.mxu0 0.0
    %854 = vmatpush1.msra.mxu0 0.0
    %855 = vmatprep.subr.mxu0 0.0
    %856 = vmatpush1.msra.mxu0 0.0
    %857 = vmatprep.subr.mxu0 0.0
    %858 = vmatpush1.msra.mxu0 0.0
    %859 = vmatprep.subr.mxu0 0.0
    %860 = vmatpush1.msra.mxu0 0.0
    %861 = vmatprep.subr.mxu0 0.0
    %862 = vmatpush1.msra.mxu0 0.0
    %863 = vmatprep.subr.mxu0 0.0
    %864 = vmatpush1.msra.mxu0 0.0
    %865 = vmatprep.subr.mxu0 0.0
    %866 = vmatpush1.msra.mxu0 0.0
    %867 = vmatprep.subr.mxu0 0.0
    %868 = vmatpush1.msra.mxu0 0.0
    %869 = vmatprep.subr.mxu0 0.0
    %870 = vmatpush1.msra.mxu0 0.0
    %871 = vmatprep.subr.mxu0 0.0
    %872 = vmatpush1.msra.mxu0 0.0
    %873 = vmatprep.subr.mxu0 0.0
    %874 = vmatpush1.msra.mxu0 0.0
    %875 = vmatprep.subr.mxu0 0.0
    %876 = vmatpush1.msra.mxu0 0.0
    %877 = vmatprep.subr.mxu0 0.0
    %878 = vmatpush1.msra.mxu0 0.0
    %879 = vmatprep.subr.mxu0 0.0
    %880 = vmatpush1.msra.mxu0 0.0
    %881 = vmatprep.subr.mxu0 0.0
    %882 = vmatpush1.msra.mxu0 0.0
    %883 = vmatprep.subr.mxu0 0.0
    %884 = vmatpush1.msra.mxu0 0.0
    %885 = vmatprep.subr.mxu0 0.0
    %886 = vmatpush1.msra.mxu0 0.0
    %887 = vmatprep.subr.mxu0 0.0
    %888 = vmatpush1.msra.mxu0 0.0
    %889 = vmatprep.subr.mxu0 0.0
    %890 = vmatpush1.msra.mxu0 0.0
    %891 = vmatprep.subr.mxu0 0.0
    %892 = vmatpush1.msra.mxu0 0.0
    %893 = vmatprep.mubr.f32.mxu0 0.0
    %v894 = vand.u32 %v631, 4294901760
    %v895 = vsub.f32 %v631, %v894
    %896 = vmatmul.mubr.f32.gmra.mrb[0].mxu0 %v895
    %v897 = vpop.f32.mrb[0].mxu0
    %v898 = vadd.f32 %v813, %v897
    %v899 = vpop.f32.mrb[0].mxu0
    %v900 = vadd.f32 %v815, %v899
    %901 = vdwg.mxu0
    %v902 = vand.u32 %v623, 4294901760
    %903 = vmatprep.subr.mxu0 %v902
    %v904 = vand.u32 %v622, 4294901760
    %905 = vmatpush1.msra.mxu0 %v904
    %v906 = vand.u32 %v625, 4294901760
    %907 = vmatprep.subr.mxu0 %v906
    %v908 = vand.u32 %v624, 4294901760
    %909 = vmatpush1.msra.mxu0 %v908
    %v910 = vand.u32 %v627, 4294901760
    %911 = vmatprep.subr.mxu0 %v910
    %v912 = vand.u32 %v626, 4294901760
    %913 = vmatpush1.msra.mxu0 %v912
    %914 = vmatprep.subr.mxu0 0.0
    %915 = vmatpush1.msra.mxu0 0.0
    %916 = vmatprep.subr.mxu0 0.0
    %917 = vmatpush1.msra.mxu0 0.0
    %918 = vmatprep.subr.mxu0 0.0
    %919 = vmatpush1.msra.mxu0 0.0
    %920 = vmatprep.subr.mxu0 0.0
    %921 = vmatpush1.msra.mxu0 0.0
    %922 = vmatprep.subr.mxu0 0.0
    %923 = vmatpush1.msra.mxu0 0.0
    %924 = vmatprep.subr.mxu0 0.0
    %925 = vmatpush1.msra.mxu0 0.0
    %926 = vmatprep.subr.mxu0 0.0
    %927 = vmatpush1.msra.mxu0 0.0
    %928 = vmatprep.subr.mxu0 0.0
    %929 = vmatpush1.msra.mxu0 0.0
    %930 = vmatprep.subr.mxu0 0.0
    %931 = vmatpush1.msra.mxu0 0.0
    %932 = vmatprep.subr.mxu0 0.0
    %933 = vmatpush1.msra.mxu0 0.0
    %934 = vmatprep.subr.mxu0 0.0
    %935 = vmatpush1.msra.mxu0 0.0
    %936 = vmatprep.subr.mxu0 0.0
    %937 = vmatpush1.msra.mxu0 0.0
    %938 = vmatprep.subr.mxu0 0.0
    %939 = vmatpush1.msra.mxu0 0.0
    %940 = vmatprep.subr.mxu0 0.0
    %941 = vmatpush1.msra.mxu0 0.0
    %942 = vmatprep.subr.mxu0 0.0
    %943 = vmatpush1.msra.mxu0 0.0
    %944 = vmatprep.subr.mxu0 0.0
    %945 = vmatpush1.msra.mxu0 0.0
    %946 = vmatprep.subr.mxu0 0.0
    %947 = vmatpush1.msra.mxu0 0.0
    %948 = vmatprep.subr.mxu0 0.0
    %949 = vmatpush1.msra.mxu0 0.0
    %950 = vmatprep.subr.mxu0 0.0
    %951 = vmatpush1.msra.mxu0 0.0
    %952 = vmatprep.subr.mxu0 0.0
    %953 = vmatpush1.msra.mxu0 0.0
    %954 = vmatprep.subr.mxu0 0.0
    %955 = vmatpush1.msra.mxu0 0.0
    %956 = vmatprep.subr.mxu0 0.0
    %957 = vmatpush1.msra.mxu0 0.0
    %958 = vmatprep.subr.mxu0 0.0
    %959 = vmatpush1.msra.mxu0 0.0
    %960 = vmatprep.subr.mxu0 0.0
    %961 = vmatpush1.msra.mxu0 0.0
    %962 = vmatprep.subr.mxu0 0.0
    %963 = vmatpush1.msra.mxu0 0.0
    %964 = vmatprep.subr.mxu0 0.0
    %965 = vmatpush1.msra.mxu0 0.0
    %966 = vmatprep.subr.mxu0 0.0
    %967 = vmatpush1.msra.mxu0 0.0
    %968 = vmatprep.subr.mxu0 0.0
    %969 = vmatpush1.msra.mxu0 0.0
    %970 = vmatprep.subr.mxu0 0.0
    %971 = vmatpush1.msra.mxu0 0.0
    %972 = vmatprep.mubr.f32.mxu0 0.0
    %v973 = vand.u32 %v631, 4294901760
    %v974 = vsub.f32 %v631, %v973
    %v975 = vand.u32 %v974, 4294901760
    %976 = vmatmul.mubr.f32.gmra.mrb[0].mxu0 %v975
    %v977 = vpop.f32.mrb[0].mxu0
    %v978 = vadd.f32 %v898, %v977
    %v979 = vpop.f32.mrb[0].mxu0
    %v980 = vadd.f32 %v900, %v979
    %981 = vdwg.mxu0
    %v982 = vand.u32 %v623, 4294901760
    %v983 = vsub.f32 %v623, %v982
    %v984 = vand.u32 %v983, 4294901760
    %985 = vmatprep.subr.mxu0 %v984
    %v986 = vand.u32 %v622, 4294901760
    %v987 = vsub.f32 %v622, %v986
    %v988 = vand.u32 %v987, 4294901760
    %989 = vmatpush1.msra.mxu0 %v988
    %v990 = vand.u32 %v625, 4294901760
    %v991 = vsub.f32 %v625, %v990
    %v992 = vand.u32 %v991, 4294901760
    %993 = vmatprep.subr.mxu0 %v992
    %v994 = vand.u32 %v624, 4294901760
    %v995 = vsub.f32 %v624, %v994
    %v996 = vand.u32 %v995, 4294901760
    %997 = vmatpush1.msra.mxu0 %v996
    %v998 = vand.u32 %v627, 4294901760
    %v999 = vsub.f32 %v627, %v998
    %v1000 = vand.u32 %v999, 4294901760
    %1001 = vmatprep.subr.mxu0 %v1000
    %v1002 = vand.u32 %v626, 4294901760
    %v1003 = vsub.f32 %v626, %v1002
    %v1004 = vand.u32 %v1003, 4294901760
    %1005 = vmatpush1.msra.mxu0 %v1004
    %1006 = vmatprep.subr.mxu0 0.0
    %1007 = vmatpush1.msra.mxu0 0.0
    %1008 = vmatprep.subr.mxu0 0.0
    %1009 = vmatpush1.msra.mxu0 0.0
    %1010 = vmatprep.subr.mxu0 0.0
    %1011 = vmatpush1.msra.mxu0 0.0
    %1012 = vmatprep.subr.mxu0 0.0
    %1013 = vmatpush1.msra.mxu0 0.0
    %1014 = vmatprep.subr.mxu0 0.0
    %1015 = vmatpush1.msra.mxu0 0.0
    %1016 = vmatprep.subr.mxu0 0.0
    %1017 = vmatpush1.msra.mxu0 0.0
    %1018 = vmatprep.subr.mxu0 0.0
    %1019 = vmatpush1.msra.mxu0 0.0
    %1020 = vmatprep.subr.mxu0 0.0
    %1021 = vmatpush1.msra.mxu0 0.0
    %1022 = vmatprep.subr.mxu0 0.0
    %1023 = vmatpush1.msra.mxu0 0.0
    %1024 = vmatprep.subr.mxu0 0.0
    %1025 = vmatpush1.msra.mxu0 0.0
    %1026 = vmatprep.subr.mxu0 0.0
    %1027 = vmatpush1.msra.mxu0 0.0
    %1028 = vmatprep.subr.mxu0 0.0
    %1029 = vmatpush1.msra.mxu0 0.0
    %1030 = vmatprep.subr.mxu0 0.0
    %1031 = vmatpush1.msra.mxu0 0.0
    %1032 = vmatprep.subr.mxu0 0.0
    %1033 = vmatpush1.msra.mxu0 0.0
    %1034 = vmatprep.subr.mxu0 0.0
    %1035 = vmatpush1.msra.mxu0 0.0
    %1036 = vmatprep.subr.mxu0 0.0
    %1037 = vmatpush1.msra.mxu0 0.0
    %1038 = vmatprep.subr.mxu0 0.0
    %1039 = vmatpush1.msra.mxu0 0.0
    %1040 = vmatprep.subr.mxu0 0.0
    %1041 = vmatpush1.msra.mxu0 0.0
    %1042 = vmatprep.subr.mxu0 0.0
    %1043 = vmatpush1.msra.mxu0 0.0
    %1044 = vmatprep.subr.mxu0 0.0
    %1045 = vmatpush1.msra.mxu0 0.0
    %1046 = vmatprep.subr.mxu0 0.0
    %1047 = vmatpush1.msra.mxu0 0.0
    %1048 = vmatprep.subr.mxu0 0.0
    %1049 = vmatpush1.msra.mxu0 0.0
    %1050 = vmatprep.subr.mxu0 0.0
    %1051 = vmatpush1.msra.mxu0 0.0
    %1052 = vmatprep.subr.mxu0 0.0
    %1053 = vmatpush1.msra.mxu0 0.0
    %1054 = vmatprep.subr.mxu0 0.0
    %1055 = vmatpush1.msra.mxu0 0.0
    %1056 = vmatprep.subr.mxu0 0.0
    %1057 = vmatpush1.msra.mxu0 0.0
    %1058 = vmatprep.subr.mxu0 0.0
    %1059 = vmatpush1.msra.mxu0 0.0
    %1060 = vmatprep.subr.mxu0 0.0
    %1061 = vmatpush1.msra.mxu0 0.0
    %1062 = vmatprep.subr.mxu0 0.0
    %1063 = vmatpush1.msra.mxu0 0.0
    %1064 = vmatprep.mubr.f32.mxu0 0.0
    %v1065 = vand.u32 %v631, 4294901760
    %1066 = vmatmul.mubr.f32.gmra.mrb[0].mxu0 %v1065
    %v1067 = vpop.f32.mrb[0].mxu0
    %v1068 = vadd.f32 %v978, %v1067
    %v1069 = vpop.f32.mrb[0].mxu0
    %v1070 = vadd.f32 %v980, %v1069
    %1071 = vdwg.mxu0
    %v1072 = vand.u32 %v623, 4294901760
    %1073 = vmatprep.subr.mxu0 %v1072
    %v1074 = vand.u32 %v622, 4294901760
    %1075 = vmatpush1.msra.mxu0 %v1074
    %v1076 = vand.u32 %v625, 4294901760
    %1077 = vmatprep.subr.mxu0 %v1076
    %v1078 = vand.u32 %v624, 4294901760
    %1079 = vmatpush1.msra.mxu0 %v1078
    %v1080 = vand.u32 %v627, 4294901760
    %1081 = vmatprep.subr.mxu0 %v1080
    %v1082 = vand.u32 %v626, 4294901760
    %1083 = vmatpush1.msra.mxu0 %v1082
    %1084 = vmatprep.subr.mxu0 0.0
    %1085 = vmatpush1.msra.mxu0 0.0
    %1086 = vmatprep.subr.mxu0 0.0
    %1087 = vmatpush1.msra.mxu0 0.0
    %1088 = vmatprep.subr.mxu0 0.0
    %1089 = vmatpush1.msra.mxu0 0.0
    %1090 = vmatprep.subr.mxu0 0.0
    %1091 = vmatpush1.msra.mxu0 0.0
    %1092 = vmatprep.subr.mxu0 0.0
    %1093 = vmatpush1.msra.mxu0 0.0
    %1094 = vmatprep.subr.mxu0 0.0
    %1095 = vmatpush1.msra.mxu0 0.0
    %1096 = vmatprep.subr.mxu0 0.0
    %1097 = vmatpush1.msra.mxu0 0.0
    %1098 = vmatprep.subr.mxu0 0.0
    %1099 = vmatpush1.msra.mxu0 0.0
    %1100 = vmatprep.subr.mxu0 0.0
    %1101 = vmatpush1.msra.mxu0 0.0
    %1102 = vmatprep.subr.mxu0 0.0
    %1103 = vmatpush1.msra.mxu0 0.0
    %1104 = vmatprep.subr.mxu0 0.0
    %1105 = vmatpush1.msra.mxu0 0.0
    %1106 = vmatprep.subr.mxu0 0.0
    %1107 = vmatpush1.msra.mxu0 0.0
    %1108 = vmatprep.subr.mxu0 0.0
    %1109 = vmatpush1.msra.mxu0 0.0
    %1110 = vmatprep.subr.mxu0 0.0
    %1111 = vmatpush1.msra.mxu0 0.0
    %1112 = vmatprep.subr.mxu0 0.0
    %1113 = vmatpush1.msra.mxu0 0.0
    %1114 = vmatprep.subr.mxu0 0.0
    %1115 = vmatpush1.msra.mxu0 0.0
    %1116 = vmatprep.subr.mxu0 0.0
    %1117 = vmatpush1.msra.mxu0 0.0
    %1118 = vmatprep.subr.mxu0 0.0
    %1119 = vmatpush1.msra.mxu0 0.0
    %1120 = vmatprep.subr.mxu0 0.0
    %1121 = vmatpush1.msra.mxu0 0.0
    %1122 = vmatprep.subr.mxu0 0.0
    %1123 = vmatpush1.msra.mxu0 0.0
    %1124 = vmatprep.subr.mxu0 0.0
    %1125 = vmatpush1.msra.mxu0 0.0
    %1126 = vmatprep.subr.mxu0 0.0
    %1127 = vmatpush1.msra.mxu0 0.0
    %1128 = vmatprep.subr.mxu0 0.0
    %1129 = vmatpush1.msra.mxu0 0.0
    %1130 = vmatprep.subr.mxu0 0.0
    %1131 = vmatpush1.msra.mxu0 0.0
    %1132 = vmatprep.subr.mxu0 0.0
    %1133 = vmatpush1.msra.mxu0 0.0
    %1134 = vmatprep.subr.mxu0 0.0
    %1135 = vmatpush1.msra.mxu0 0.0
    %1136 = vmatprep.subr.mxu0 0.0
    %1137 = vmatpush1.msra.mxu0 0.0
    %1138 = vmatprep.subr.mxu0 0.0
    %1139 = vmatpush1.msra.mxu0 0.0
    %1140 = vmatprep.subr.mxu0 0.0
    %1141 = vmatpush1.msra.mxu0 0.0
    %1142 = vmatprep.mubr.f32.mxu0 0.0
    %v1143 = vand.u32 %v631, 4294901760
    %1144 = vmatmul.mubr.f32.gmra.mrb[0].mxu0 %v1143
    %v1145 = vpop.f32.mrb[0].mxu0
    %v1146 = vadd.f32 %v1068, %v1145
    %v1147 = vpop.f32.mrb[0].mxu0
    %v1148 = vadd.f32 %v1070, %v1147
    %1149 = vdwg.mxu0
    %1150 = vst [vmem:[#allocation6] sm:$0x3f] %v1146
    %1151 = vst [vmem:[#allocation6 + $0x8] sm:$0x3f] %v1148
    %v1152 = vmul.f32 %v34, 0.5
    %v1153 = vtanh.pop %v1152
    %v1154 = vmul.f32 %v1153, 0.5
    %v1155 = vadd.f32 %v1154, 0.5
    %v1156 = vmul.f32 %v34, %v1155
    %v1158 = vcombine.high %v1156, %v1156
    %v1160 = vrot.slane %v1156, 5
    %v1161 = vrot.slane %v1158, 5
    %vm1164 = vcmask 1042432
    %v1165 = vsel %vm1164, %v1156, %v1160
    %v1166 = vsel %vm1164, %v1158, %v1161
    %v1167 = vld [vmem:[%s3] sm:$0x3f]
    %1169 = vset.pattern.permute.xlu0 0
    %1170 = vperm.xlu0 %1169, %v1167
    %v1171 = vpop.permute.xlu0 %1170
    %v1173 = vmul.f32 %v1171, %v1165
    %v1174 = vmul.f32 %v1171, %v1166
    %v1175 = vld [vmem:[%s4] sm:$0x3f]
    %1177 = vset.pattern.permute.xlu0 0
    %1178 = vperm.xlu0 %1177, %v1175
    %v1179 = vpop.permute.xlu0 %1178
    %v1181 = vmul.f32 %v1179, %v1146
    %v1182 = vmul.f32 %v1179, %v1148
    %v1183 = vadd.f32 %v1173, %v1181
    %v1184 = vadd.f32 %v1174, %v1182
    %1185 = vst [vmem:[#allocation4] sm:$0x3f] %v1183
    %1186 = vst [vmem:[#allocation4 + $0x8] sm:$0x3f] %v1184
    %v1187 = vsel %vm1164, %v1183, 0.0
    %v1188 = vrot.slane %v1187, 4
    %v1189 = vadd.f32 %v1187, %v1188
    %v1190 = vrot.slane %v1189, 2
    %v1191 = vadd.f32 %v1189, %v1190
    %v1192 = vrot.slane %v1191, 1
    %v1193 = vadd.f32 %v1191, %v1192
    %v1194 = vsel %vm1164, %v1184, 0.0
    %v1195 = vrot.slane %v1194, 4
    %v1196 = vadd.f32 %v1194, %v1195
    %v1197 = vrot.slane %v1196, 2
    %v1198 = vadd.f32 %v1196, %v1197
    %v1199 = vrot.slane %v1198, 1
    %v1200 = vadd.f32 %v1198, %v1199
    %v1203 = vrot.slane %v1183, 3
    %v1204 = vrot.slane %v1184, 3
    %v1207 = vsel %vm1164, %v1203, 0.0
    %v1208 = vrot.slane %v1207, 4
    %v1209 = vadd.f32 %v1207, %v1208
    %v1210 = vrot.slane %v1209, 2
    %v1211 = vadd.f32 %v1209, %v1210
    %v1212 = vrot.slane %v1211, 1
    %v1213 = vadd.f32 %v1211, %v1212
    %v1214 = vsel %vm1164, %v1204, 0.0
    %v1215 = vrot.slane %v1214, 4
    %v1216 = vadd.f32 %v1214, %v1215
    %v1217 = vrot.slane %v1216, 2
    %v1218 = vadd.f32 %v1216, %v1217
    %v1219 = vrot.slane %v1218, 1
    %v1220 = vadd.f32 %v1218, %v1219
    %vm1221 = vcmask 1040384
    %v1222 = vsel %vm1221, %v1193, %v1213
    %v1223 = vsel %vm1221, %v1200, %v1220
    %v1226 = vcombine.low %v1222, %v1223
    %v1228 = vunpack.c.l.s4 1983009808
    %v1229 = vunpack.c.0.s8 %v1228
    %v1230 = vlaneseq
    %v1231 = vshrl.u32 %v1230, 7
    %v1232 = vsub.s32 %v1229, %v1231
    %v1233 = vrot.slane %v1226, %v1232
    %1235 = vst [vmem:[#allocation2] sm:$0xf] %v1233
    // Predicated region
    $region34: #{tpu_custom_call.1} parent=1 // pred_check
      _
    $region35: #{tpu_custom_call.1} parent=1 // pred_check_branch
      %1237 = sbr.rel (0) target = $region37
    $region36: #{tpu_custom_call.1} parent=1 // pred_region
      %s1239 = ssub.s32 64, 64
      %1240 = vsyncadd [#allocation3], %s1239
      %s1242 = sshll.u32 [#allocation2], 4
      %s1243 = int_to_ptr.vmem [resolvable:$true] %s1242
      %1245 = dma.vmem_to_hbm [thread:$0]  %s1243, 64, %s8, [#allocation3]
    $region37: #{tpu_custom_call.1} parent=1 // pred_fallthru
      _
    // Predicated region
    $region38: #{tpu_custom_call.1} parent=1 // pred_check
      _
    $region39: #{tpu_custom_call.1} parent=1 // pred_check_branch
      %1247 = sbr.rel (0) target = $region41
    $region40: #{tpu_custom_call.1} parent=1 // pred_region
      %s1249 = ssub.s32 256, 256
      %1250 = vsyncadd [#allocation5], %s1249
      %s1252 = sshll.u32 [#allocation4], 4
      %s1253 = int_to_ptr.vmem [resolvable:$true] %s1252
      %1255 = dma.vmem_to_hbm [thread:$0]  %s1253, 256, %s9, [#allocation5]
    $region41: #{tpu_custom_call.1} parent=1 // pred_fallthru
      _
    // Predicated region
    $region42: #{tpu_custom_call.1} parent=1 // pred_check
      _
    $region43: #{tpu_custom_call.1} parent=1 // pred_check_branch
      %1257 = sbr.rel (0) target = $region45
    $region44: #{tpu_custom_call.1} parent=1 // pred_region
      %s1259 = ssub.s32 256, 256
      %1260 = vsyncadd [#allocation5], %s1259
      %s1262 = sshll.u32 [#allocation6], 4
      %s1263 = int_to_ptr.vmem [resolvable:$true] %s1262
      %1265 = dma.vmem_to_hbm [thread:$0]  %s1263, 256, %s10, [#allocation5]
    $region45: #{tpu_custom_call.1} parent=1 // pred_fallthru
      _
    // Predicated region
    $region46: #{tpu_custom_call.1} parent=1 // pred_check
      _
    $region47: #{tpu_custom_call.1} parent=1 // pred_check_branch
      %1267 = sbr.rel (0) target = $region49
    $region48: #{tpu_custom_call.1} parent=1 // pred_region
      %1268 = dma.done [#allocation3], 64
    $region49: #{tpu_custom_call.1} parent=1 // pred_fallthru
      _
    // Predicated region
    $region50: #{tpu_custom_call.1} parent=1 // pred_check
      _
    $region51: #{tpu_custom_call.1} parent=1 // pred_check_branch
      %1270 = sbr.rel (0) target = $region53
    $region52: #{tpu_custom_call.1} parent=1 // pred_region
      %1271 = dma.done [#allocation5], 256
    $region53: #{tpu_custom_call.1} parent=1 // pred_fallthru
      _
    // Predicated region
    $region54: #{tpu_custom_call.1} parent=1 // pred_check
      _
    $region55: #{tpu_custom_call.1} parent=1 // pred_check_branch
      %1273 = sbr.rel (0) target = $region57
    $region56: #{tpu_custom_call.1} parent=1 // pred_region
      %1274 = dma.done [#allocation5], 256
    $region57: #{tpu_custom_call.1} parent=1 // pred_fallthru
      _
    %1275 = vsyncpa [#allocation3], 1
    %1276 = vsyncpa [#allocation5], 1

</llo_original>
